<compile_context>
chip_gen: v7x
topology: tpu7x:2x2x1
jax: 0.10.0
libtpu: 0.0.40
codegen_flags: <defaults>
</compile_context>

<pallas_src>
import jax
import jax.numpy as jnp
from jax.experimental import pallas as pl
from jax.experimental.pallas import tpu as pltpu


# ----------------------------------------------------------------------------
# Pallas kernel: fused embedding gather + concat
# ----------------------------------------------------------------------------
def _feature_prep_kernel(z_ref, table_ref, dense_ref, out_ref):
    # z_ref:     [tm, 1]   int32 categorical ids for this row tile
    # table_ref: [V, E]    embedding table (row 0 is the padding row)
    # dense_ref: [tm, Fd]  dense features for this row tile
    # out_ref:   [tm, E+Fd]
    V, E = table_ref.shape
    Fd = dense_ref.shape[1]
    tm = z_ref.shape[0]

    z = z_ref[...]                                   # [tm, 1] int32

    # Exact one-hot select-accumulate gather (V is static and small; the
    # Python loop is fully unrolled at trace time).
    emb = jnp.zeros((tm, E), jnp.float32)
    for v in range(V):
        row = table_ref[pl.ds(v, 1), :].astype(jnp.float32)   # [1, E]
        sel = (z == v).astype(jnp.float32)                    # [tm, 1]
        emb = emb + sel * row                                  # broadcast mul

    # Lane-dense concat: both column slices are 128-lane aligned.
    out_ref[:, 0:E] = emb.astype(out_ref.dtype)
    out_ref[:, E:E + Fd] = dense_ref[...].astype(out_ref.dtype)


# ----------------------------------------------------------------------------
# Wrapper
# ----------------------------------------------------------------------------
def _round_up(x, m):
    return ((x + m - 1) // m) * m


def feature_prep(z, x_dense, embedding_weight):
    """z: [B, N] int ids; x_dense: [B, N, Fd]; embedding_weight: [V, E]
    -> [B, N, E + Fd]  (matches FeaturePrep.forward)."""
    B, N = z.shape
    Bd, Nd, Fd = x_dense.shape
    assert (Bd, Nd) == (B, N)
    V, E = embedding_weight.shape
    out_dim = E + Fd
    R = B * N

    # Flatten rows (metadata-only reshapes; contiguous).
    z2 = z.reshape(R, 1).astype(jnp.int32)
    d2 = x_dense.reshape(R, Fd)

    # Row-tile selection: multiple of 8 sublanes, capped at 128 rows, and
    # expose >= 2 blocks for TensorCore sharding whenever there is enough work.
    tm = min(128, _round_up(R, 8))
    if _round_up(R, tm) // tm < 2 and R >= 16:
        tm = _round_up(R, 16) // 2
    R_pad = _round_up(R, tm)
    if R_pad != R:
        # Padding rows use id 0 (the zero padding embedding) and zero dense
        # features; they are sliced off afterwards.
        z2 = jnp.pad(z2, ((0, R_pad - R), (0, 0)))
        d2 = jnp.pad(d2, ((0, R_pad - R), (0, 0)))

    out = pl.pallas_call(
        _feature_prep_kernel,
        out_shape=jax.ShapeDtypeStruct((R_pad, out_dim), x_dense.dtype),
        grid=(R_pad // tm,),
        in_specs=[
            pl.BlockSpec((tm, 1), lambda i: (i, 0)),       # ids (row tile)
            pl.BlockSpec((V, E), lambda i: (0, 0)),        # full table (small)
            pl.BlockSpec((tm, Fd), lambda i: (i, 0)),      # dense (row tile)
        ],
        out_specs=pl.BlockSpec((tm, out_dim), lambda i: (i, 0)),
        compiler_params=pltpu.CompilerParams(
            dimension_semantics=("parallel",)),
    )(z2, embedding_weight, d2)

    return out[:R].reshape(B, N, out_dim)


# ----------------------------------------------------------------------------
# Pure-JAX reference
# ----------------------------------------------------------------------------
def _feature_prep_ref(z, x_dense, embedding_weight):
    emb = embedding_weight[z]                        # gather rows
    return jnp.concatenate([emb, x_dense], axis=-1)


# ----------------------------------------------------------------------------
if __name__ == "__main__":
    B, N = 2, 16
    num_categories = 8
    emb_dim = 128
    f_dense = 128

    key = jax.random.PRNGKey(0)
    kz, kx, kw = jax.random.split(key, 3)

    # ids in [0, num_categories]; 0 is the padding index
    z = jax.random.randint(kz, (B, N), 0, num_categories + 1, dtype=jnp.int32)
    x_dense = jax.random.normal(kx, (B, N, f_dense), jnp.float32)

    # nn.Embedding(num_categories + 1, emb_dim, padding_idx=0): row 0 is zeros.
    embedding_weight = jax.random.normal(
        kw, (num_categories + 1, emb_dim), jnp.float32)
    embedding_weight = embedding_weight.at[0].set(0.0)

    out = jax.block_until_ready(feature_prep(z, x_dense, embedding_weight))
    ref = _feature_prep_ref(z, x_dense, embedding_weight)

    assert out.shape == (B, N, emb_dim + f_dense)
    assert jnp.allclose(out, ref, atol=1e-6, rtol=1e-6)
    print("KERNEL_OK")
</pallas_src>

<mosaic_0001>
module attributes {stable_mosaic.version = 11 : i64} {
  func.func @_feature_prep_kernel(%arg0: i32, %arg1: memref<16x1xi32, #tpu.memory_space<vmem>>, %arg2: memref<9x128xf32, #tpu.memory_space<vmem>>, %arg3: memref<16x128xf32, #tpu.memory_space<vmem>>, %arg4: memref<16x256xf32, #tpu.memory_space<vmem>>) attributes {dimension_semantics = [#tpu.dimension_semantics<parallel>], iteration_bounds = array<i64: 2>, scalar_prefetch = 0 : i64, scratch_operands = 0 : i64, tpu.core_type = #tpu.core_type<tc>, window_params = [{transform_indices = @transform_0, window_bounds = array<i64: 16, 1>}, {pipeline_mode = #tpu.pipeline_mode<synchronous>, transform_indices = @transform_1, window_bounds = array<i64: 9, 128>}, {transform_indices = @transform_2, window_bounds = array<i64: 16, 128>}, {transform_indices = @transform_3, window_bounds = array<i64: 16, 256>}]} {
    %c0 = arith.constant 0 : index
    %c0_0 = arith.constant 0 : index
    %0 = vector.load %arg1[%c0, %c0_0] : memref<16x1xi32, #tpu.memory_space<vmem>>, vector<16x1xi32>
    %cst = arith.constant 0.000000e+00 : f32
    %1 = vector.broadcast %cst : f32 to vector<16x128xf32>
    %c0_1 = arith.constant 0 : index
    %c0_2 = arith.constant 0 : index
    %2 = vector.load %arg2[%c0_1, %c0_2] : memref<9x128xf32, #tpu.memory_space<vmem>>, vector<1x128xf32>
    %c0_i32 = arith.constant 0 : i32
    %3 = vector.broadcast %c0_i32 : i32 to vector<16x1xi32>
    %4 = arith.cmpi eq, %0, %3 : vector<16x1xi32>
    %5 = arith.extui %4 : vector<16x1xi1> to vector<16x1xi32>
    %6 = arith.sitofp %5 : vector<16x1xi32> to vector<16x1xf32>
    %7 = vector.broadcast %6 : vector<16x1xf32> to vector<16x128xf32>
    %8 = vector.broadcast %2 : vector<1x128xf32> to vector<16x128xf32>
    %9 = arith.mulf %7, %8 : vector<16x128xf32>
    %10 = arith.addf %1, %9 : vector<16x128xf32>
    %c1 = arith.constant 1 : index
    %c0_3 = arith.constant 0 : index
    %11 = vector.load %arg2[%c1, %c0_3] : memref<9x128xf32, #tpu.memory_space<vmem>>, vector<1x128xf32>
    %c1_i32 = arith.constant 1 : i32
    %12 = vector.broadcast %c1_i32 : i32 to vector<16x1xi32>
    %13 = arith.cmpi eq, %0, %12 : vector<16x1xi32>
    %14 = arith.extui %13 : vector<16x1xi1> to vector<16x1xi32>
    %15 = arith.sitofp %14 : vector<16x1xi32> to vector<16x1xf32>
    %16 = vector.broadcast %15 : vector<16x1xf32> to vector<16x128xf32>
    %17 = vector.broadcast %11 : vector<1x128xf32> to vector<16x128xf32>
    %18 = arith.mulf %16, %17 : vector<16x128xf32>
    %19 = arith.addf %10, %18 : vector<16x128xf32>
    %c2 = arith.constant 2 : index
    %c0_4 = arith.constant 0 : index
    %20 = vector.load %arg2[%c2, %c0_4] : memref<9x128xf32, #tpu.memory_space<vmem>>, vector<1x128xf32>
    %c2_i32 = arith.constant 2 : i32
    %21 = vector.broadcast %c2_i32 : i32 to vector<16x1xi32>
    %22 = arith.cmpi eq, %0, %21 : vector<16x1xi32>
    %23 = arith.extui %22 : vector<16x1xi1> to vector<16x1xi32>
    %24 = arith.sitofp %23 : vector<16x1xi32> to vector<16x1xf32>
    %25 = vector.broadcast %24 : vector<16x1xf32> to vector<16x128xf32>
    %26 = vector.broadcast %20 : vector<1x128xf32> to vector<16x128xf32>
    %27 = arith.mulf %25, %26 : vector<16x128xf32>
    %28 = arith.addf %19, %27 : vector<16x128xf32>
    %c3 = arith.constant 3 : index
    %c0_5 = arith.constant 0 : index
    %29 = vector.load %arg2[%c3, %c0_5] : memref<9x128xf32, #tpu.memory_space<vmem>>, vector<1x128xf32>
    %c3_i32 = arith.constant 3 : i32
    %30 = vector.broadcast %c3_i32 : i32 to vector<16x1xi32>
    %31 = arith.cmpi eq, %0, %30 : vector<16x1xi32>
    %32 = arith.extui %31 : vector<16x1xi1> to vector<16x1xi32>
    %33 = arith.sitofp %32 : vector<16x1xi32> to vector<16x1xf32>
    %34 = vector.broadcast %33 : vector<16x1xf32> to vector<16x128xf32>
    %35 = vector.broadcast %29 : vector<1x128xf32> to vector<16x128xf32>
    %36 = arith.mulf %34, %35 : vector<16x128xf32>
    %37 = arith.addf %28, %36 : vector<16x128xf32>
    %c4 = arith.constant 4 : index
    %c0_6 = arith.constant 0 : index
    %38 = vector.load %arg2[%c4, %c0_6] : memref<9x128xf32, #tpu.memory_space<vmem>>, vector<1x128xf32>
    %c4_i32 = arith.constant 4 : i32
    %39 = vector.broadcast %c4_i32 : i32 to vector<16x1xi32>
    %40 = arith.cmpi eq, %0, %39 : vector<16x1xi32>
    %41 = arith.extui %40 : vector<16x1xi1> to vector<16x1xi32>
    %42 = arith.sitofp %41 : vector<16x1xi32> to vector<16x1xf32>
    %43 = vector.broadcast %42 : vector<16x1xf32> to vector<16x128xf32>
    %44 = vector.broadcast %38 : vector<1x128xf32> to vector<16x128xf32>
    %45 = arith.mulf %43, %44 : vector<16x128xf32>
    %46 = arith.addf %37, %45 : vector<16x128xf32>
    %c5 = arith.constant 5 : index
    %c0_7 = arith.constant 0 : index
    %47 = vector.load %arg2[%c5, %c0_7] : memref<9x128xf32, #tpu.memory_space<vmem>>, vector<1x128xf32>
    %c5_i32 = arith.constant 5 : i32
    %48 = vector.broadcast %c5_i32 : i32 to vector<16x1xi32>
    %49 = arith.cmpi eq, %0, %48 : vector<16x1xi32>
    %50 = arith.extui %49 : vector<16x1xi1> to vector<16x1xi32>
    %51 = arith.sitofp %50 : vector<16x1xi32> to vector<16x1xf32>
    %52 = vector.broadcast %51 : vector<16x1xf32> to vector<16x128xf32>
    %53 = vector.broadcast %47 : vector<1x128xf32> to vector<16x128xf32>
    %54 = arith.mulf %52, %53 : vector<16x128xf32>
    %55 = arith.addf %46, %54 : vector<16x128xf32>
    %c6 = arith.constant 6 : index
    %c0_8 = arith.constant 0 : index
    %56 = vector.load %arg2[%c6, %c0_8] : memref<9x128xf32, #tpu.memory_space<vmem>>, vector<1x128xf32>
    %c6_i32 = arith.constant 6 : i32
    %57 = vector.broadcast %c6_i32 : i32 to vector<16x1xi32>
    %58 = arith.cmpi eq, %0, %57 : vector<16x1xi32>
    %59 = arith.extui %58 : vector<16x1xi1> to vector<16x1xi32>
    %60 = arith.sitofp %59 : vector<16x1xi32> to vector<16x1xf32>
    %61 = vector.broadcast %60 : vector<16x1xf32> to vector<16x128xf32>
    %62 = vector.broadcast %56 : vector<1x128xf32> to vector<16x128xf32>
    %63 = arith.mulf %61, %62 : vector<16x128xf32>
    %64 = arith.addf %55, %63 : vector<16x128xf32>
    %c7 = arith.constant 7 : index
    %c0_9 = arith.constant 0 : index
    %65 = vector.load %arg2[%c7, %c0_9] : memref<9x128xf32, #tpu.memory_space<vmem>>, vector<1x128xf32>
    %c7_i32 = arith.constant 7 : i32
    %66 = vector.broadcast %c7_i32 : i32 to vector<16x1xi32>
    %67 = arith.cmpi eq, %0, %66 : vector<16x1xi32>
    %68 = arith.extui %67 : vector<16x1xi1> to vector<16x1xi32>
    %69 = arith.sitofp %68 : vector<16x1xi32> to vector<16x1xf32>
    %70 = vector.broadcast %69 : vector<16x1xf32> to vector<16x128xf32>
    %71 = vector.broadcast %65 : vector<1x128xf32> to vector<16x128xf32>
    %72 = arith.mulf %70, %71 : vector<16x128xf32>
    %73 = arith.addf %64, %72 : vector<16x128xf32>
    %c8 = arith.constant 8 : index
    %c0_10 = arith.constant 0 : index
    %74 = vector.load %arg2[%c8, %c0_10] : memref<9x128xf32, #tpu.memory_space<vmem>>, vector<1x128xf32>
    %c8_i32 = arith.constant 8 : i32
    %75 = vector.broadcast %c8_i32 : i32 to vector<16x1xi32>
    %76 = arith.cmpi eq, %0, %75 : vector<16x1xi32>
    %77 = arith.extui %76 : vector<16x1xi1> to vector<16x1xi32>
    %78 = arith.sitofp %77 : vector<16x1xi32> to vector<16x1xf32>
    %79 = vector.broadcast %78 : vector<16x1xf32> to vector<16x128xf32>
    %80 = vector.broadcast %74 : vector<1x128xf32> to vector<16x128xf32>
    %81 = arith.mulf %79, %80 : vector<16x128xf32>
    %82 = arith.addf %73, %81 : vector<16x128xf32>
    %c0_11 = arith.constant 0 : index
    %c0_12 = arith.constant 0 : index
    %83 = vector.load %arg4[%c0_11, %c0_12] : memref<16x256xf32, #tpu.memory_space<vmem>>, vector<16x128xf32>
    tpu.vector_store %arg4[%c0_11, %c0_12], %82 {strides = array<i32>} : memref<16x256xf32, #tpu.memory_space<vmem>>, vector<16x128xf32>,
    %c0_13 = arith.constant 0 : index
    %c0_14 = arith.constant 0 : index
    %84 = vector.load %arg3[%c0_13, %c0_14] : memref<16x128xf32, #tpu.memory_space<vmem>>, vector<16x128xf32>
    %c0_15 = arith.constant 0 : index
    %c128 = arith.constant 128 : index
    %85 = vector.load %arg4[%c0_15, %c128] : memref<16x256xf32, #tpu.memory_space<vmem>>, vector<16x128xf32>
    tpu.vector_store %arg4[%c0_15, %c128], %84 {strides = array<i32>} : memref<16x256xf32, #tpu.memory_space<vmem>>, vector<16x128xf32>,
    return
  }
  func.func @transform_0(%arg0: i32) -> (i32, i32) {
    %c0_i32 = arith.constant 0 : i32
    %c0_i32_0 = arith.constant 0 : i32
    return %arg0, %c0_i32 : i32, i32
  }
  func.func @transform_1(%arg0: i32) -> (i32, i32) {
    %c0_i32 = arith.constant 0 : i32
    %c0_i32_0 = arith.constant 0 : i32
    %c0_i32_1 = arith.constant 0 : i32
    return %c0_i32, %c0_i32_0 : i32, i32
  }
  func.func @transform_2(%arg0: i32) -> (i32, i32) {
    %c0_i32 = arith.constant 0 : i32
    %c0_i32_0 = arith.constant 0 : i32
    return %arg0, %c0_i32 : i32, i32
  }
  func.func @transform_3(%arg0: i32) -> (i32, i32) {
    %c0_i32 = arith.constant 0 : i32
    %c0_i32_0 = arith.constant 0 : i32
    return %arg0, %c0_i32 : i32, i32
  }
}

</mosaic_0001>

<llo_original>
// kernel: tpu_custom_call.1
$region0: #{tpu_custom_call.1}
  #allocation0 [shape = 'u32[]', space=smem, size = 0x4, offset = 0x4, fixed_abs, tag = 'smem constant byte address 0x4 - core index']
  #allocation1 [shape = 'u32[144,128]{1,0:T(1,128)}', space=vmem, size = 0x12000, scoped, tag = 'internal scratch']
  %s0 = inlined_call_operand.vmem [shape: s32[32,1], index: 0, kind: input, shape index: {}]
  %s1 = inlined_call_operand.hbm [shape: f32[9,128], index: 1, kind: input, shape index: {}]
  %s2 = inlined_call_operand.vmem [shape: f32[32,128], index: 2, kind: input, shape index: {}]
  %s3 = inlined_call_operand.hbm [shape: f32[32,256], index: 3, kind: output, shape index: {}]
  %s4 = sld [smem:[#allocation0]]
  $region49: #{tpu_custom_call.1} parent=0
    _
  %s6 = ssub.s32 1, %s4
  %s7 = scalar_select 0, %s6, %s4
  $region1: #{tpu_custom_call.1} parent=0
    #allocation2 [shape = 'u8[8192]{0}', space=vmem, size = 0x2000, scoped, tag = 'input window, operand 1, single buffered']
    #allocation3 [shape = 's32[2]{0}', space=sflag, size = 0x8, scoped, tag = 'scoped memory for tpu_custom_call.1']
    #allocation4 [shape = 's32[2]{0}', space=sflag, size = 0x8, scoped, tag = 'scoped memory for tpu_custom_call.1']
    #allocation5 [shape = 'u8[32768]{0}', space=vmem, size = 0x8000, scoped, tag = 'output window, operand 0']
    %8 = vsyncpa [#allocation3], 0
    %9 = vsyncpa [#allocation4], 0
    %s10 = scalar_lea.sflag [#allocation4], 1
    %11 = vsyncpa %s10, 0
    loop: start=0, step=1, limit=4
    $region2: #{tpu_custom_call.1} parent=1 // loop_pre_header
      _
    $region3: #{tpu_custom_call.1} parent=1 // loop_header
      %s13 = sphi 0, %s17
      %p14 = scmp.ge.s32.totalorder %s13, 4
      %s23 = sphi 0, %s25
      %s26 = sphi 0, %s23
      %s27 = sphi 0, %s26
      %s43 = sphi 0, %s27
      %s47 = sphi 0, %s47
      %s49 = sphi 0, %s47
      %s50 = sphi 0, %s49
      %s64 = sphi 0, %s50
      %s70 = sphi 0, %s72
      %s73 = sphi 0, %s70
      %s74 = sphi 0, %s73
      %s90 = sphi 0, %s74
      %s96 = sphi 0, %s98
      %s99 = sphi 0, %s96
      %s100 = sphi 0, %s99
      %s116 = sphi 0, %s100
    $region4: #{tpu_custom_call.1} parent=1 // loop_header_branch
      %16 = sbr.rel (%p14) target = $region8
    $region5: #{tpu_custom_call.1} parent=1 // loop_body
      %s18 = ssub.s32 %s13, 1
      %s19 = ssub.s32 %s13, 2
      %s20 = sadd.s32 %s13, 1
      %s21 = ssub.s32 %s13, %s20
      %p22 = scmp.eq.s32.totalorder %s21, 0
      %s24 = sadd.s32 %s23, 1
      %s25 = scalar_select %p22, %s23, %s24
      %p28 = pneg %p22
      %p29 = scmp.eq.s32.totalorder %s13, 1
      %p30 = por %p28, %p29
      %p31 = scmp.ne.s32.totalorder %s23, %s26
      %p32 = scmp.eq.s32.totalorder %s13, 0
      %p33 = por %p31, %p32
      %p34 = scmp.ne.s32.totalorder %s23, %s26
      %p35 = scmp.eq.s32.totalorder %s18, 1
      %p36 = por %p34, %p35
      %p37 = scmp.ne.s32.totalorder %s26, %s27
      %p38 = scmp.eq.s32.totalorder %s18, 0
      %p39 = por %p37, %p38
      %p40 = scmp.ne.s32.totalorder %s26, %s27
      %p41 = scmp.eq.s32.totalorder %s19, 1
      %p42 = por %p40, %p41
      %p44 = scmp.ne.s32.totalorder %s27, %s43
      %p45 = scmp.eq.s32.totalorder %s19, 0
      %p46 = por %p44, %p45
      %s48 = sadd.s32 %s47, 1
      %p51 = scmp.eq.s32.totalorder %s13, 1
      %p52 = scmp.ne.s32.totalorder %s47, %s49
      %p53 = scmp.eq.s32.totalorder %s13, 0
      %p54 = por %p52, %p53
      %p55 = scmp.ne.s32.totalorder %s47, %s49
      %p56 = scmp.eq.s32.totalorder %s18, 1
      %p57 = por %p55, %p56
      %p58 = scmp.ne.s32.totalorder %s49, %s50
      %p59 = scmp.eq.s32.totalorder %s18, 0
      %p60 = por %p58, %p59
      %p61 = scmp.ne.s32.totalorder %s49, %s50
      %p62 = scmp.eq.s32.totalorder %s19, 1
      %p63 = por %p61, %p62
      %p65 = scmp.ne.s32.totalorder %s50, %s64
      %p66 = scmp.eq.s32.totalorder %s19, 0
      %p67 = por %p65, %p66
      %s68 = ssub.s32 %s13, %s20
      %p69 = scmp.eq.s32.totalorder %s68, 0
      %s71 = sadd.s32 %s70, 1
      %s72 = scalar_select %p69, %s70, %s71
      %p75 = pneg %p69
      %p76 = scmp.eq.s32.totalorder %s13, 1
      %p77 = por %p75, %p76
      %p78 = scmp.ne.s32.totalorder %s70, %s73
      %p79 = scmp.eq.s32.totalorder %s13, 0
      %p80 = por %p78, %p79
      %p81 = scmp.ne.s32.totalorder %s70, %s73
      %p82 = scmp.eq.s32.totalorder %s18, 1
      %p83 = por %p81, %p82
      %p84 = scmp.ne.s32.totalorder %s73, %s74
      %p85 = scmp.eq.s32.totalorder %s18, 0
      %p86 = por %p84, %p85
      %p87 = scmp.ne.s32.totalorder %s73, %s74
      %p88 = scmp.eq.s32.totalorder %s19, 1
      %p89 = por %p87, %p88
      %p91 = scmp.ne.s32.totalorder %s74, %s90
      %p92 = scmp.eq.s32.totalorder %s19, 0
      %p93 = por %p91, %p92
      %s94 = ssub.s32 %s13, %s20
      %p95 = scmp.eq.s32.totalorder %s94, 0
      %s97 = sadd.s32 %s96, 1
      %s98 = scalar_select %p95, %s96, %s97
      %p101 = pneg %p95
      %p102 = scmp.eq.s32.totalorder %s13, 1
      %p103 = por %p101, %p102
      %p104 = scmp.ne.s32.totalorder %s96, %s99
      %p105 = scmp.eq.s32.totalorder %s13, 0
      %p106 = por %p104, %p105
      %p107 = scmp.ne.s32.totalorder %s96, %s99
      %p108 = scmp.eq.s32.totalorder %s18, 1
      %p109 = por %p107, %p108
      %p110 = scmp.ne.s32.totalorder %s99, %s100
      %p111 = scmp.eq.s32.totalorder %s18, 0
      %p112 = por %p110, %p111
      %p113 = scmp.ne.s32.totalorder %s99, %s100
      %p114 = scmp.eq.s32.totalorder %s19, 1
      %p115 = por %p113, %p114
      %p117 = scmp.ne.s32.totalorder %s100, %s116
      %p118 = scmp.eq.s32.totalorder %s19, 0
      %p119 = por %p117, %p118
      %p120 = scmp.le.s32.totalorder 1, %s13
      %p121 = scmp.lt.s32.totalorder %s13, 3
      %p122 = pnand %p120, %p121
      %p123 = pneg %p122
      // Predicated region
      $region9: #{tpu_custom_call.1} parent=5 // pred_check
        _
      $region10: #{tpu_custom_call.1} parent=5 // pred_check_branch
        %125 = sbr.rel (%p122) target = $region12
      $region11: #{tpu_custom_call.1} parent=5 // pred_region
        %s126 = ssub.s32 %s13, 1
        // Predicated region
        $region13: #{tpu_custom_call.1} parent=11 // pred_check
          %p127 = pneg %p60
        $region14: #{tpu_custom_call.1} parent=11 // pred_check_branch
          %129 = sbr.rel (%p127) target = $region16
        $region15: #{tpu_custom_call.1} parent=11 // pred_region
          %s131 = ssub.s32 256, 256
          %132 = vsyncadd [#allocation3], %s131
          %s133 = sshll.u32 [#allocation2], 4
          %s134 = int_to_ptr.vmem [resolvable:$true] %s133
          %139 = dma.hbm_to_vmem [thread:$0]  %s1, 256, %s134, [#allocation3], 128, 128, 8
        $region16: #{tpu_custom_call.1} parent=11 // pred_fallthru
          _
      $region12: #{tpu_custom_call.1} parent=5 // pred_fallthru
        _
      %p140 = scmp.lt.s32.totalorder %s13, 2
      // Predicated region
      $region17: #{tpu_custom_call.1} parent=5 // pred_check
        %p141 = pneg %p140
      $region18: #{tpu_custom_call.1} parent=5 // pred_check_branch
        %143 = sbr.rel (%p141) target = $region20
      $region19: #{tpu_custom_call.1} parent=5 // pred_region
        // Predicated region
        $region21: #{tpu_custom_call.1} parent=19 // pred_check
          %p144 = pneg %p33
        $region22: #{tpu_custom_call.1} parent=19 // pred_check_branch
          %146 = sbr.rel (%p144) target = $region24
        $region23: #{tpu_custom_call.1} parent=19 // pred_region
          %s147 = smul.u32 2, %s13
          %p148 = scmp.lt.s32.totalorder %s147, 3
          %s149 = scalar_select %p148, %s147, 3
          %s150 = smul.addr %s149, 8
          %s151 = scalar_lea.vmem %s0, %s150
          %s152 = smul.u32 2, %s13
        $region24: #{tpu_custom_call.1} parent=19 // pred_fallthru
          _
        // Predicated region
        $region25: #{tpu_custom_call.1} parent=19 // pred_check
          %p153 = pneg %p80
        $region26: #{tpu_custom_call.1} parent=19 // pred_check_branch
          %155 = sbr.rel (%p153) target = $region28
        $region27: #{tpu_custom_call.1} parent=19 // pred_region
          %s156 = smul.u32 2, %s13
          %p157 = scmp.lt.s32.totalorder %s156, 3
          %s158 = scalar_select %p157, %s156, 3
          %s159 = smul.addr %s158, 8
          %s160 = scalar_lea.vmem %s2, %s159
          %s161 = smul.u32 2, %s13
        $region28: #{tpu_custom_call.1} parent=19 // pred_fallthru
          _
      $region20: #{tpu_custom_call.1} parent=5 // pred_fallthru
        _
      %p162 = scmp.le.s32.totalorder 1, %s13
      %p163 = scmp.lt.s32.totalorder %s13, 3
      %p164 = pnand %p162, %p163
      %p165 = pneg %p164
      // Predicated region
      $region29: #{tpu_custom_call.1} parent=5 // pred_check
        _
      $region30: #{tpu_custom_call.1} parent=5 // pred_check_branch
        %167 = sbr.rel (%p164) target = $region32
      $region31: #{tpu_custom_call.1} parent=5 // pred_region
        %s168 = ssub.s32 %s13, 1
        // Predicated region
        $region33: #{tpu_custom_call.1} parent=31 // pred_check
          %p169 = pneg %p60
        $region34: #{tpu_custom_call.1} parent=31 // pred_check_branch
          %171 = sbr.rel (%p169) target = $region36
        $region35: #{tpu_custom_call.1} parent=31 // pred_region
          %172 = dma.done [#allocation3], 256
        $region36: #{tpu_custom_call.1} parent=31 // pred_fallthru
          _
        %s173 = smul.u32 2, %s18
        %p174 = scmp.lt.s32.totalorder %s173, 3
        %s175 = scalar_select %p174, %s173, 3
        %s176 = smul.addr %s175, 8
        %s177 = scalar_lea.vmem %s0, %s176
        %p178 = pneg %p39
        %p179 = pneg %p36
        %p180 = pneg %p60
        %p181 = pneg %p57
        %s182 = smul.u32 2, %s18
        %p183 = scmp.lt.s32.totalorder %s182, 3
        %s184 = scalar_select %p183, %s182, 3
        %s185 = smul.addr %s184, 8
        %s186 = scalar_lea.vmem %s2, %s185
        %p187 = pneg %p86
        %p188 = pneg %p83
        %p189 = pneg %p112
        %p190 = pneg %p109
        %s191 = sand.u32 %s99, 1
        %s192 = scalar_lea.sflag [#allocation4], %s191
        %s193 = sand.u32 %s99, 1
        %s194 = smul.addr %s193, 32
        %s195 = scalar_lea.vmem [#allocation5], %s194
        %s196 = smul.u32 2, %s18
        %p197 = scmp.lt.s32.totalorder %s196, 3
        %s198 = scalar_select %p197, %s196, 3
        %s199 = smul.addr %s198, 8
        %s200 = scalar_lea.vmem %s0, %s199
        %s201 = smul.u32 2, %s18
        %s202 = smul.u32 2, %s18
        %p203 = scmp.lt.s32.totalorder %s202, 3
        %s204 = scalar_select %p203, %s202, 3
        %s205 = smul.addr %s204, 8
        %s206 = scalar_lea.vmem %s2, %s205
        %s207 = smul.u32 2, %s18
        %s208 = smul.u32 2, %s18
        %v209 = vld [vmem:[%s200] sm:$0xff]
        %v210 = vld [vmem:[%s200 + $0x8] sm:$0xff]
        %v211 = vld [vmem:[#allocation2] sm:$0x1]
        %vm212 = vcmp.eq.s32.totalorder %v209, 0
        %vm213 = vcmp.eq.s32.totalorder %v210, 0
        %v214 = vsel %vm212, 1, 0
        %v215 = vsel %vm213, 1, 0
        %v216 = vcvt.s32.f32 %v214
        %v217 = vcvt.s32.f32 %v215
        %219 = vset.pattern.permute.xlu0 0
        %220 = vperm.xlu0 %219, %v216
        %v221 = vpop.permute.xlu0 %220
        %224 = vset.pattern.permute.xlu0 0
        %225 = vperm.xlu0 %224, %v217
        %v226 = vpop.permute.xlu0 %225
        %v228 = vlaneseq
        %v229 = vshrl.u32 %v228, 7
        %v230 = vsub.s32 0, %v229
        %v231 = vrot.slane %v211, %v230
        %v232 = vmul.f32 %v221, %v231
        %v233 = vmul.f32 %v226, %v231
        %v234 = vadd.f32 %v232, 0.0
        %v235 = vadd.f32 %v233, 0.0
        %v236 = vld [vmem:[#allocation2 + $0x1] sm:$0x1]
        %vm237 = vcmp.eq.s32.totalorder %v209, 1
        %vm238 = vcmp.eq.s32.totalorder %v210, 1
        %v239 = vsel %vm237, 1, 0
        %v240 = vsel %vm238, 1, 0
        %v241 = vcvt.s32.f32 %v239
        %v242 = vcvt.s32.f32 %v240
        %244 = vset.pattern.permute.xlu0 0
        %245 = vperm.xlu0 %244, %v241
        %v246 = vpop.permute.xlu0 %245
        %249 = vset.pattern.permute.xlu0 0
        %250 = vperm.xlu0 %249, %v242
        %v251 = vpop.permute.xlu0 %250
        %v253 = vlaneseq
        %v254 = vshrl.u32 %v253, 7
        %v255 = vsub.s32 0, %v254
        %v256 = vrot.slane %v236, %v255
        %v257 = vmul.f32 %v246, %v256
        %v258 = vmul.f32 %v251, %v256
        %v259 = vadd.f32 %v234, %v257
        %v260 = vadd.f32 %v235, %v258
        %v261 = vld [vmem:[#allocation2 + $0x2] sm:$0x1]
        %vm262 = vcmp.eq.s32.totalorder %v209, 2
        %vm263 = vcmp.eq.s32.totalorder %v210, 2
        %v264 = vsel %vm262, 1, 0
        %v265 = vsel %vm263, 1, 0
        %v266 = vcvt.s32.f32 %v264
        %v267 = vcvt.s32.f32 %v265
        %269 = vset.pattern.permute.xlu0 0
        %270 = vperm.xlu0 %269, %v266
        %v271 = vpop.permute.xlu0 %270
        %274 = vset.pattern.permute.xlu0 0
        %275 = vperm.xlu0 %274, %v267
        %v276 = vpop.permute.xlu0 %275
        %v278 = vlaneseq
        %v279 = vshrl.u32 %v278, 7
        %v280 = vsub.s32 0, %v279
        %v281 = vrot.slane %v261, %v280
        %v282 = vmul.f32 %v271, %v281
        %v283 = vmul.f32 %v276, %v281
        %v284 = vadd.f32 %v259, %v282
        %v285 = vadd.f32 %v260, %v283
        %v286 = vld [vmem:[#allocation2 + $0x3] sm:$0x1]
        %vm287 = vcmp.eq.s32.totalorder %v209, 3
        %vm288 = vcmp.eq.s32.totalorder %v210, 3
        %v289 = vsel %vm287, 1, 0
        %v290 = vsel %vm288, 1, 0
        %v291 = vcvt.s32.f32 %v289
        %v292 = vcvt.s32.f32 %v290
        %294 = vset.pattern.permute.xlu0 0
        %295 = vperm.xlu0 %294, %v291
        %v296 = vpop.permute.xlu0 %295
        %299 = vset.pattern.permute.xlu0 0
        %300 = vperm.xlu0 %299, %v292
        %v301 = vpop.permute.xlu0 %300
        %v303 = vlaneseq
        %v304 = vshrl.u32 %v303, 7
        %v305 = vsub.s32 0, %v304
        %v306 = vrot.slane %v286, %v305
        %v307 = vmul.f32 %v296, %v306
        %v308 = vmul.f32 %v301, %v306
        %v309 = vadd.f32 %v284, %v307
        %v310 = vadd.f32 %v285, %v308
        %v311 = vld [vmem:[#allocation2 + $0x4] sm:$0x1]
        %vm312 = vcmp.eq.s32.totalorder %v209, 4
        %vm313 = vcmp.eq.s32.totalorder %v210, 4
        %v314 = vsel %vm312, 1, 0
        %v315 = vsel %vm313, 1, 0
        %v316 = vcvt.s32.f32 %v314
        %v317 = vcvt.s32.f32 %v315
        %319 = vset.pattern.permute.xlu0 0
        %320 = vperm.xlu0 %319, %v316
        %v321 = vpop.permute.xlu0 %320
        %324 = vset.pattern.permute.xlu0 0
        %325 = vperm.xlu0 %324, %v317
        %v326 = vpop.permute.xlu0 %325
        %v328 = vlaneseq
        %v329 = vshrl.u32 %v328, 7
        %v330 = vsub.s32 0, %v329
        %v331 = vrot.slane %v311, %v330
        %v332 = vmul.f32 %v321, %v331
        %v333 = vmul.f32 %v326, %v331
        %v334 = vadd.f32 %v309, %v332
        %v335 = vadd.f32 %v310, %v333
        %v336 = vld [vmem:[#allocation2 + $0x5] sm:$0x1]
        %vm337 = vcmp.eq.s32.totalorder %v209, 5
        %vm338 = vcmp.eq.s32.totalorder %v210, 5
        %v339 = vsel %vm337, 1, 0
        %v340 = vsel %vm338, 1, 0
        %v341 = vcvt.s32.f32 %v339
        %v342 = vcvt.s32.f32 %v340
        %344 = vset.pattern.permute.xlu0 0
        %345 = vperm.xlu0 %344, %v341
        %v346 = vpop.permute.xlu0 %345
        %349 = vset.pattern.permute.xlu0 0
        %350 = vperm.xlu0 %349, %v342
        %v351 = vpop.permute.xlu0 %350
        %v353 = vlaneseq
        %v354 = vshrl.u32 %v353, 7
        %v355 = vsub.s32 0, %v354
        %v356 = vrot.slane %v336, %v355
        %v357 = vmul.f32 %v346, %v356
        %v358 = vmul.f32 %v351, %v356
        %v359 = vadd.f32 %v334, %v357
        %v360 = vadd.f32 %v335, %v358
        %v361 = vld [vmem:[#allocation2 + $0x6] sm:$0x1]
        %vm362 = vcmp.eq.s32.totalorder %v209, 6
        %vm363 = vcmp.eq.s32.totalorder %v210, 6
        %v364 = vsel %vm362, 1, 0
        %v365 = vsel %vm363, 1, 0
        %v366 = vcvt.s32.f32 %v364
        %v367 = vcvt.s32.f32 %v365
        %369 = vset.pattern.permute.xlu0 0
        %370 = vperm.xlu0 %369, %v366
        %v371 = vpop.permute.xlu0 %370
        %374 = vset.pattern.permute.xlu0 0
        %375 = vperm.xlu0 %374, %v367
        %v376 = vpop.permute.xlu0 %375
        %v378 = vlaneseq
        %v379 = vshrl.u32 %v378, 7
        %v380 = vsub.s32 0, %v379
        %v381 = vrot.slane %v361, %v380
        %v382 = vmul.f32 %v371, %v381
        %v383 = vmul.f32 %v376, %v381
        %v384 = vadd.f32 %v359, %v382
        %v385 = vadd.f32 %v360, %v383
        %v386 = vld [vmem:[#allocation2 + $0x7] sm:$0x1]
        %vm387 = vcmp.eq.s32.totalorder %v209, 7
        %vm388 = vcmp.eq.s32.totalorder %v210, 7
        %v389 = vsel %vm387, 1, 0
        %v390 = vsel %vm388, 1, 0
        %v391 = vcvt.s32.f32 %v389
        %v392 = vcvt.s32.f32 %v390
        %394 = vset.pattern.permute.xlu0 0
        %395 = vperm.xlu0 %394, %v391
        %v396 = vpop.permute.xlu0 %395
        %399 = vset.pattern.permute.xlu0 0
        %400 = vperm.xlu0 %399, %v392
        %v401 = vpop.permute.xlu0 %400
        %v403 = vlaneseq
        %v404 = vshrl.u32 %v403, 7
        %v405 = vsub.s32 0, %v404
        %v406 = vrot.slane %v386, %v405
        %v407 = vmul.f32 %v396, %v406
        %v408 = vmul.f32 %v401, %v406
        %v409 = vadd.f32 %v384, %v407
        %v410 = vadd.f32 %v385, %v408
        %v411 = vld [vmem:[#allocation2 + $0x8] sm:$0x1]
        %vm412 = vcmp.eq.s32.totalorder %v209, 8
        %vm413 = vcmp.eq.s32.totalorder %v210, 8
        %v414 = vsel %vm412, 1, 0
        %v415 = vsel %vm413, 1, 0
        %v416 = vcvt.s32.f32 %v414
        %v417 = vcvt.s32.f32 %v415
        %419 = vset.pattern.permute.xlu0 0
        %420 = vperm.xlu0 %419, %v416
        %v421 = vpop.permute.xlu0 %420
        %424 = vset.pattern.permute.xlu0 0
        %425 = vperm.xlu0 %424, %v417
        %v426 = vpop.permute.xlu0 %425
        %v428 = vlaneseq
        %v429 = vshrl.u32 %v428, 7
        %v430 = vsub.s32 0, %v429
        %v431 = vrot.slane %v411, %v430
        %v432 = vmul.f32 %v421, %v431
        %v433 = vmul.f32 %v426, %v431
        %v434 = vadd.f32 %v409, %v432
        %v435 = vadd.f32 %v410, %v433
        %436 = vst [vmem:[%s195] sm:$0xff] %v434
        %437 = vst [vmem:[%s195 + $0x10] sm:$0xff] %v435
        %v438 = vld [vmem:[%s206] sm:$0xff]
        %v439 = vld [vmem:[%s206 + $0x8] sm:$0xff]
        %440 = vst [vmem:[%s195 + $0x8] sm:$0xff] %v438
        %441 = vst [vmem:[%s195 + $0x18] sm:$0xff] %v439
        %s442 = sand.u32 %s99, 1
        %s443 = scalar_lea.sflag [#allocation4], %s442
        %s444 = sand.u32 %s99, 1
        %s445 = smul.addr %s444, 32
        %s446 = scalar_lea.vmem [#allocation5], %s445
        // Predicated region
        $region37: #{tpu_custom_call.1} parent=31 // pred_check
          %p447 = pneg %p109
        $region38: #{tpu_custom_call.1} parent=31 // pred_check_branch
          %449 = sbr.rel (%p447) target = $region40
        $region39: #{tpu_custom_call.1} parent=31 // pred_region
          %s450 = smul.u32 2, %s18
          %s452 = ssub.s32 512, 512
          %453 = vsyncadd %s443, %s452
          %s454 = smul.addr %s450, 2
          %s455 = smul.addr %s454, 128
          %s456 = scalar_lea.hbm %s3, %s455
          %s457 = sshll.u32 %s446, 4
          %s458 = int_to_ptr.vmem [resolvable:$true] %s457
          %463 = dma.vmem_to_hbm [thread:$0]  %s458, 512, %s456, %s443, 256, 256, 16
        $region40: #{tpu_custom_call.1} parent=31 // pred_fallthru
          _
      $region32: #{tpu_custom_call.1} parent=5 // pred_fallthru
        _
      %p464 = scmp.le.s32.totalorder 2, %s13
      // Predicated region
      $region41: #{tpu_custom_call.1} parent=5 // pred_check
        %p465 = pneg %p464
      $region42: #{tpu_custom_call.1} parent=5 // pred_check_branch
        %467 = sbr.rel (%p465) target = $region44
      $region43: #{tpu_custom_call.1} parent=5 // pred_region
        %s468 = ssub.s32 %s13, 2
        // Predicated region
        $region45: #{tpu_custom_call.1} parent=43 // pred_check
          %p469 = pneg %p115
        $region46: #{tpu_custom_call.1} parent=43 // pred_check_branch
          %471 = sbr.rel (%p469) target = $region48
        $region47: #{tpu_custom_call.1} parent=43 // pred_region
          %s472 = sand.u32 %s100, 1
          %s473 = scalar_lea.sflag [#allocation4], %s472
          %s474 = sand.u32 %s100, 1
          %s475 = smul.addr %s474, 32
          %s476 = scalar_lea.vmem [#allocation5], %s475
          %477 = dma.done %s473, 512
        $region48: #{tpu_custom_call.1} parent=43 // pred_fallthru
          _
      $region44: #{tpu_custom_call.1} parent=5 // pred_fallthru
        _
    $region6: #{tpu_custom_call.1} parent=1 // loop_footer
      %s17 = sadd.s32 1, %s13
    $region7: #{tpu_custom_call.1} parent=1 // loop_footer_branch
      %12 = sbr.rel target = $region3
    $region8: #{tpu_custom_call.1} parent=1 // loop_exit
      _
    %478 = vsyncpa [#allocation3], 1
    %s479 = scalar_lea.sflag [#allocation3], 1
    %480 = vsyncpa %s479, 1
    %481 = vsyncpa [#allocation4], 1
    %s482 = scalar_lea.sflag [#allocation4], 1
    %483 = vsyncpa %s482, 1

</llo_original>
